<compile_context>
chip_gen: v6e
topology: v6e:2x2x1
jax: 0.10.0
libtpu: 0.0.40
codegen_flags: <defaults>
</compile_context>

<pallas_src>
import jax
import jax.numpy as jnp
from jax.experimental import pallas as pl
from jax.experimental.pallas import tpu as pltpu


def _attention_kernel(enc_ref, hb_ref, we_ref, wv_ref, out_ref):
    # enc_ref : (TB, S, E)   encoder outputs tile
    # hb_ref  : (TB, D)      dec_last @ W_h + b  (precomputed in wrapper)
    # we_ref  : (E, D)       encoder-side slice of attn weight (transposed)
    # wv_ref  : (1, D)       v.weight row
    # out_ref : (TB, S)      softmax(scores) over S

    # energy = tanh( enc @ W_e + (dec @ W_h + b) )
    # Single 3-D contraction over E; no reshapes/relayouts inside the kernel.
    e_proj = jnp.einsum(
        "bse,ed->bsd", enc_ref[...], we_ref[...],
        preferred_element_type=jnp.float32,
    )                                                           # (TB, S, D)
    energy = jnp.tanh(e_proj + hb_ref[...][:, None, :])         # (TB, S, D)

    # score = energy @ v.T  ->  VPU multiply + lane (XLU) reduction
    # (avoids an N=1 MXU matmul).
    score = jnp.sum(energy * wv_ref[...][None, :, :], axis=-1)  # (TB, S)

    # numerically-stable softmax over the src_len (lane) axis; exact divide.
    m = jnp.max(score, axis=-1, keepdims=True)
    p = jnp.exp(score - m)
    denom = jnp.sum(p, axis=-1, keepdims=True)
    out_ref[...] = p / denom


def _pick_batch_tile(B, S, E, D, itemsize=4, budget_bytes=16 << 20,
                     target_rows=512, min_grid_steps=2):
    """Pick a batch tile TB such that:
      * TB*S reaches ~target_rows (amortizes MXU push/drain + per-step cost),
      * the double-buffered streams fit the VMEM budget,
      * TB is a multiple of 8 (or == B) so the 2-D blocks are legal,
      * the grid has >= min_grid_steps steps when B is large enough
        (lets the 'parallel' axis shard across v7x's 2 TensorCores)."""
    per_batch = (S * E + D + S) * itemsize * 2          # double-buffered streams
    cap = max(1, budget_bytes // per_batch)
    want = max(1, -(-target_rows // S))                 # ceil(target_rows / S)
    tb = min(cap, want)
    if tb >= B:
        tb = B
    else:
        tb = max(8, (tb // 8) * 8)                      # multiple of 8 -> legal block
        if tb >= B:
            tb = B
    if (min_grid_steps > 1 and B >= 8 * min_grid_steps
            and tb > B // min_grid_steps):
        tb = max(8, ((B // min_grid_steps) // 8) * 8)
    return tb


def attention_forward(encoder_outputs, decoder_hidden, W_attn, b_attn, W_v):
    """Pallas equivalent of Attention.forward (returned value only).

    encoder_outputs : [B, S, E]
    decoder_hidden  : [L, B, D]   (last layer is used)
    W_attn          : [D, E + D]  (PyTorch Linear weight, out x in)
    b_attn          : [D]
    W_v             : [1, D]      (bias-free Linear)
    returns         : [B, 1, S]
    """
    B, S, E = encoder_outputs.shape
    D = W_attn.shape[0]

    # Slice before transposing: last-layer hidden, [B, D].
    dec_last = decoder_hidden[-1]

    # Split attn weight once: cat order in PyTorch is (hidden, encoder_outputs),
    # so the first D input columns act on `hidden`, the rest on enc outputs.
    Wt = W_attn.T                                 # [D + E, D]
    W_h = Wt[:D, :]                               # [D, D]
    W_e = Wt[D:, :]                               # [E, D]

    # Hoisted decoder projection + bias: one full-batch matmul outside the
    # kernel; kept lane-dense 2-D [B, D].
    hb = dec_last @ W_h + b_attn                  # [B, D]

    TB = _pick_batch_tile(B, S, E, D)
    Bp = -(-B // TB) * TB                         # pad batch to a multiple of TB
    if Bp != B:
        pad = Bp - B
        enc_in = jnp.pad(encoder_outputs, ((0, pad), (0, 0), (0, 0)))
        hb_in = jnp.pad(hb, ((0, pad), (0, 0)))
    else:
        enc_in, hb_in = encoder_outputs, hb

    grid = (Bp // TB,)

    out2d = pl.pallas_call(
        _attention_kernel,
        out_shape=jax.ShapeDtypeStruct((Bp, S), jnp.float32),
        grid_spec=pltpu.PrefetchScalarGridSpec(
            num_scalar_prefetch=0,
            grid=grid,
            in_specs=[
                pl.BlockSpec((TB, S, E), lambda i: (i, 0, 0)),   # encoder outputs
                pl.BlockSpec((TB, D), lambda i: (i, 0)),         # dec proj + bias
                pl.BlockSpec((E, D), lambda i: (0, 0)),          # W_e (shared)
                pl.BlockSpec((1, D), lambda i: (0, 0)),          # v weight row
            ],
            out_specs=pl.BlockSpec((TB, S), lambda i: (i, 0)),   # lane-dense 2-D out
        ),
        compiler_params=pltpu.CompilerParams(
            dimension_semantics=("parallel",),
            vmem_limit_bytes=32 << 20,
        ),
    )(enc_in, hb_in, W_e, W_v)

    return out2d[:B, None, :]                     # [B, 1, S]


def _reference(encoder_outputs, decoder_hidden, W_attn, b_attn, W_v):
    """Pure-JAX mirror of the PyTorch forward (returned value only)."""
    B, S, E = encoder_outputs.shape
    dec = jnp.transpose(decoder_hidden, (1, 0, 2))[:, -1:, :]          # [B,1,D]
    hidden = jnp.tile(dec, (1, S, 1))                                   # [B,S,D]
    cat = jnp.concatenate([hidden, encoder_outputs], axis=2)            # [B,S,D+E]
    energy = jnp.tanh(cat @ W_attn.T + b_attn)                          # [B,S,D]
    attention = (energy @ W_v.T)[..., 0]                                # [B,S]
    attention = jax.nn.softmax(attention, axis=1)
    return attention[:, None, :]                                        # [B,1,S]


if __name__ == "__main__":
    hid_dim = 16
    E = D = hid_dim * 2      # enc_dim = dec_hid_dim = 32
    B, S, L = 2, 8, 2        # batch, src_len, decoder hidden stack depth

    key = jax.random.PRNGKey(0)
    k1, k2, k3, k4, k5 = jax.random.split(key, 5)

    encoder_outputs = jax.random.normal(k1, (B, S, E), dtype=jnp.float32)
    decoder_hidden = jax.random.normal(k2, (L, B, D), dtype=jnp.float32)

    # Deterministic parameter init (same shapes as nn.Linear weights/bias).
    W_attn = 0.1 * jax.random.normal(k3, (D, E + D), dtype=jnp.float32)  # attn.weight
    b_attn = 0.1 * jax.random.normal(k4, (D,), dtype=jnp.float32)        # attn.bias
    W_v = 0.1 * jax.random.normal(k5, (1, D), dtype=jnp.float32)         # v.weight

    out = attention_forward(encoder_outputs, decoder_hidden, W_attn, b_attn, W_v)
    out = jax.block_until_ready(out)

    ref = _reference(encoder_outputs, decoder_hidden, W_attn, b_attn, W_v)
    assert out.shape == (B, 1, S), out.shape
    assert jnp.allclose(out, ref, atol=1e-3, rtol=1e-3), "mismatch vs reference"
    # rows must still sum to 1 (softmax sanity)
    assert jnp.allclose(jnp.sum(out, axis=-1), 1.0, atol=1e-3)

    print("KERNEL_OK")
</pallas_src>

<mosaic_0001>
module attributes {stable_mosaic.version = 11 : i64} {
  func.func @_attention_kernel(%arg0: i32, %arg1: memref<2x8x32xf32, #tpu.memory_space<vmem>>, %arg2: memref<2x32xf32, #tpu.memory_space<vmem>>, %arg3: memref<32x32xf32, #tpu.memory_space<vmem>>, %arg4: memref<1x32xf32, #tpu.memory_space<vmem>>, %arg5: memref<2x8xf32, #tpu.memory_space<vmem>>) attributes {dimension_semantics = [#tpu.dimension_semantics<parallel>], iteration_bounds = array<i64: 1>, scalar_prefetch = 0 : i64, scratch_operands = 0 : i64, tpu.core_type = #tpu.core_type<tc>, window_params = [{transform_indices = @transform_0, window_bounds = array<i64: 2, 8, 32>}, {transform_indices = @transform_1, window_bounds = array<i64: 2, 32>}, {pipeline_mode = #tpu.pipeline_mode<synchronous>, transform_indices = @transform_2, window_bounds = array<i64: 32, 32>}, {pipeline_mode = #tpu.pipeline_mode<synchronous>, transform_indices = @transform_3, window_bounds = array<i64: 1, 32>}, {transform_indices = @transform_4, window_bounds = array<i64: 2, 8>}]} {
    %c0 = arith.constant 0 : index
    %c0_0 = arith.constant 0 : index
    %c0_1 = arith.constant 0 : index
    %0 = vector.load %arg1[%c0, %c0_0, %c0_1] : memref<2x8x32xf32, #tpu.memory_space<vmem>>, vector<2x8x32xf32>
    %c0_2 = arith.constant 0 : index
    %c0_3 = arith.constant 0 : index
    %1 = vector.load %arg3[%c0_2, %c0_3] : memref<32x32xf32, #tpu.memory_space<vmem>>, vector<32x32xf32>
    "tpu.trace_start"() <{level = 10 : i32, message = "bse,ed->bsd"}> : () -> ()
    %cst = arith.constant dense<0.000000e+00> : vector<2x8x32xf32>
    %2 = tpu.matmul %0, %1, %cst {dimension_numbers = #tpu.dot_dimension_numbers<[2], [0], [0, 1], [1], [0, 0, 0, 1, 1, 1], [], []>} : vector<2x8x32xf32>, vector<32x32xf32>, vector<2x8x32xf32> -> vector<2x8x32xf32>
    "tpu.trace_stop"() : () -> ()
    %c0_4 = arith.constant 0 : index
    %c0_5 = arith.constant 0 : index
    %3 = vector.load %arg2[%c0_4, %c0_5] : memref<2x32xf32, #tpu.memory_space<vmem>>, vector<2x32xf32>
    %4 = vector.shape_cast %3 : vector<2x32xf32> to vector<2x1x32xf32>
    %5 = vector.broadcast %4 : vector<2x1x32xf32> to vector<2x8x32xf32>
    %6 = arith.addf %2, %5 : vector<2x8x32xf32>
    %7 = math.tanh %6 : vector<2x8x32xf32>
    %c0_6 = arith.constant 0 : index
    %c0_7 = arith.constant 0 : index
    %8 = vector.load %arg4[%c0_6, %c0_7] : memref<1x32xf32, #tpu.memory_space<vmem>>, vector<1x32xf32>
    %9 = vector.shape_cast %8 : vector<1x32xf32> to vector<1x1x32xf32>
    %10 = vector.broadcast %9 : vector<1x1x32xf32> to vector<2x8x32xf32>
    %11 = arith.mulf %7, %10 : vector<2x8x32xf32>
    %cst_8 = arith.constant dense<0.000000e+00> : vector<2x8xf32>
    %12 = vector.multi_reduction <add>, %11, %cst_8 [2] : vector<2x8x32xf32> to vector<2x8xf32>
    %cst_9 = arith.constant dense<0xFF800000> : vector<2xf32>
    %13 = vector.multi_reduction <maximumf>, %12, %cst_9 [1] : vector<2x8xf32> to vector<2xf32>
    %14 = vector.shape_cast %13 : vector<2xf32> to vector<2x1xf32>
    %15 = vector.broadcast %14 : vector<2x1xf32> to vector<2x8xf32>
    %16 = arith.subf %12, %15 : vector<2x8xf32>
    %17 = math.exp %16 : vector<2x8xf32>
    %cst_10 = arith.constant dense<0.000000e+00> : vector<2xf32>
    %18 = vector.multi_reduction <add>, %17, %cst_10 [1] : vector<2x8xf32> to vector<2xf32>
    %19 = vector.shape_cast %18 : vector<2xf32> to vector<2x1xf32>
    %20 = vector.broadcast %19 : vector<2x1xf32> to vector<2x8xf32>
    %21 = arith.divf %17, %20 : vector<2x8xf32>
    %c0_11 = arith.constant 0 : index
    %c0_12 = arith.constant 0 : index
    %22 = vector.load %arg5[%c0_11, %c0_12] : memref<2x8xf32, #tpu.memory_space<vmem>>, vector<2x8xf32>
    tpu.vector_store %arg5[%c0_11, %c0_12], %21 {strides = array<i32>} : memref<2x8xf32, #tpu.memory_space<vmem>>, vector<2x8xf32>,
    return
  }
  func.func @transform_0(%arg0: i32) -> (i32, i32, i32) {
    %c0_i32 = arith.constant 0 : i32
    %c0_i32_0 = arith.constant 0 : i32
    %c0_i32_1 = arith.constant 0 : i32
    return %arg0, %c0_i32, %c0_i32_0 : i32, i32, i32
  }
  func.func @transform_1(%arg0: i32) -> (i32, i32) {
    %c0_i32 = arith.constant 0 : i32
    %c0_i32_0 = arith.constant 0 : i32
    return %arg0, %c0_i32 : i32, i32
  }
  func.func @transform_2(%arg0: i32) -> (i32, i32) {
    %c0_i32 = arith.constant 0 : i32
    %c0_i32_0 = arith.constant 0 : i32
    %c0_i32_1 = arith.constant 0 : i32
    return %c0_i32, %c0_i32_0 : i32, i32
  }
  func.func @transform_3(%arg0: i32) -> (i32, i32) {
    %c0_i32 = arith.constant 0 : i32
    %c0_i32_0 = arith.constant 0 : i32
    %c0_i32_1 = arith.constant 0 : i32
    return %c0_i32, %c0_i32_0 : i32, i32
  }
  func.func @transform_4(%arg0: i32) -> (i32, i32) {
    %c0_i32 = arith.constant 0 : i32
    %c0_i32_0 = arith.constant 0 : i32
    return %arg0, %c0_i32 : i32, i32
  }
}

</mosaic_0001>

<llo_original>
// kernel: tpu_custom_call.1
$region0: #{tpu_custom_call.1}
  #allocation0 [shape = 'u32[]', space=smem, size = 0x4, offset = 0x4, fixed_abs, tag = 'smem constant byte address 0x4 - core index']
  #allocation1 [shape = 'u32[144,128]{1,0:T(1,128)}', space=vmem, size = 0x12000, scoped, tag = 'internal scratch']
  %s0 = inlined_call_operand.hbm [shape: f32[2,8,32], index: 0, kind: input, shape index: {}]
  %s1 = inlined_call_operand.hbm [shape: f32[2,32], index: 1, kind: input, shape index: {}]
  %s2 = inlined_call_operand.hbm [shape: f32[32,32], index: 2, kind: input, shape index: {}]
  %s3 = inlined_call_operand.vmem [shape: f32[1,32], index: 3, kind: input, shape index: {}]
  %s4 = inlined_call_operand.hbm [shape: f32[2,8], index: 4, kind: output, shape index: {}]
  %s5 = sld [smem:[#allocation0]]
  $region38: #{tpu_custom_call.1} parent=0
    _
  %s7 = ssub.s32 1, %s5
  %s8 = scalar_select 0, %s7, %s5
  $region1: #{tpu_custom_call.1} parent=0
    #allocation2 [shape = 'u8[8192]{0}', space=vmem, size = 0x2000, scoped, tag = 'input window, operand 0, single buffered']
    #allocation3 [shape = 's32[1]{0}', space=sflag, size = 0x4, scoped, tag = 'scoped memory for tpu_custom_call.1']
    #allocation4 [shape = 's32[1]{0}', space=sflag, size = 0x4, scoped, tag = 'scoped memory for tpu_custom_call.1']
    #allocation5 [shape = 'u8[1024]{0}', space=vmem, size = 0x400, scoped, tag = 'input window, operand 1, single buffered']
    #allocation6 [shape = 's32[1]{0}', space=sflag, size = 0x4, scoped, tag = 'scoped memory for tpu_custom_call.1']
    #allocation7 [shape = 'u8[16384]{0}', space=vmem, size = 0x4000, scoped, tag = 'input window, operand 2, single buffered']
    #allocation8 [shape = 'u8[1024]{0}', space=vmem, size = 0x400, scoped, tag = 'output window, operand 0, single buffered']
    %9 = vsyncpa [#allocation3], 0
    %10 = vsyncpa [#allocation6], 0
    %11 = vsyncpa [#allocation4], 0
    // Predicated region
    $region2: #{tpu_custom_call.1} parent=1 // pred_check
      _
    $region3: #{tpu_custom_call.1} parent=1 // pred_check_branch
      %13 = sbr.rel (0) target = $region5
    $region4: #{tpu_custom_call.1} parent=1 // pred_region
      %s15 = ssub.s32 256, 256
      %16 = vsyncadd [#allocation3], %s15
      %s17 = sshll.u32 [#allocation2], 4
      %s18 = int_to_ptr.vmem [resolvable:$true] %s17
      %23 = dma.hbm_to_vmem [thread:$0]  %s0, 256, %s18, [#allocation3], 128, 128, 8
    $region5: #{tpu_custom_call.1} parent=1 // pred_fallthru
      _
    // Predicated region
    $region6: #{tpu_custom_call.1} parent=1 // pred_check
      _
    $region7: #{tpu_custom_call.1} parent=1 // pred_check_branch
      %25 = sbr.rel (0) target = $region9
    $region8: #{tpu_custom_call.1} parent=1 // pred_region
      %s27 = ssub.s32 32, 32
      %28 = vsyncadd [#allocation6], %s27
      %s30 = sshll.u32 [#allocation5], 4
      %s31 = int_to_ptr.vmem [resolvable:$true] %s30
      %33 = dma.hbm_to_vmem [thread:$0]  %s1, 32, %s31, [#allocation6]
    $region9: #{tpu_custom_call.1} parent=1 // pred_fallthru
      _
    // Predicated region
    $region10: #{tpu_custom_call.1} parent=1 // pred_check
      _
    $region11: #{tpu_custom_call.1} parent=1 // pred_check_branch
      %35 = sbr.rel (0) target = $region13
    $region12: #{tpu_custom_call.1} parent=1 // pred_region
      %s37 = ssub.s32 512, 512
      %38 = vsyncadd [#allocation6], %s37
      %s39 = sshll.u32 [#allocation7], 4
      %s40 = int_to_ptr.vmem [resolvable:$true] %s39
      %45 = dma.hbm_to_vmem [thread:$0]  %s2, 512, %s40, [#allocation6], 128, 128, 8
    $region13: #{tpu_custom_call.1} parent=1 // pred_fallthru
      _
    // Predicated region
    $region14: #{tpu_custom_call.1} parent=1 // pred_check
      _
    $region15: #{tpu_custom_call.1} parent=1 // pred_check_branch
      %47 = sbr.rel (0) target = $region17
    $region16: #{tpu_custom_call.1} parent=1 // pred_region
      _
    $region17: #{tpu_custom_call.1} parent=1 // pred_fallthru
      _
    // Predicated region
    $region18: #{tpu_custom_call.1} parent=1 // pred_check
      _
    $region19: #{tpu_custom_call.1} parent=1 // pred_check_branch
      %49 = sbr.rel (0) target = $region21
    $region20: #{tpu_custom_call.1} parent=1 // pred_region
      %50 = dma.done [#allocation3], 256
    $region21: #{tpu_custom_call.1} parent=1 // pred_fallthru
      _
    // Predicated region
    $region22: #{tpu_custom_call.1} parent=1 // pred_check
      _
    $region23: #{tpu_custom_call.1} parent=1 // pred_check_branch
      %52 = sbr.rel (0) target = $region25
    $region24: #{tpu_custom_call.1} parent=1 // pred_region
      %53 = dma.done [#allocation6], 32
    $region25: #{tpu_custom_call.1} parent=1 // pred_fallthru
      _
    // Predicated region
    $region26: #{tpu_custom_call.1} parent=1 // pred_check
      _
    $region27: #{tpu_custom_call.1} parent=1 // pred_check_branch
      %55 = sbr.rel (0) target = $region29
    $region28: #{tpu_custom_call.1} parent=1 // pred_region
      %56 = dma.done [#allocation6], 512
    $region29: #{tpu_custom_call.1} parent=1 // pred_fallthru
      _
    %v57 = vld [vmem:[#allocation2] sm:$0xff]
    %v58 = vld [vmem:[#allocation2 + $0x8] sm:$0xff]
    %v59 = vld [vmem:[#allocation7] sm:$0xff]
    %v60 = vld [vmem:[#allocation7 + $0x8] sm:$0xff]
    %v61 = vld [vmem:[#allocation7 + $0x10] sm:$0xff]
    %v62 = vld [vmem:[#allocation7 + $0x18] sm:$0xff]
    %v63 = vld [vmem:[#allocation5] sm:$0x3]
    %v66 = vunpack.c.l.s4 1966171168
    %v67 = vunpack.c.0.s8 %v66
    %v68 = vlaneseq
    %v69 = vshrl.u32 %v68, 7
    %v70 = vsub.s32 %v67, %v69
    %v71 = vrot.slane %v63, %v70
    %v72 = vcombine.high %v71, %v71
    %v74 = vunpack.c.l.s4 1966171168
    %v75 = vunpack.c.0.s8 %v74
    %v76 = vlaneseq
    %v77 = vshrl.u32 %v76, 7
    %v78 = vsub.s32 %v75, %v77
    %v79 = vrot.slane %v71, %v78
    %v81 = vunpack.c.l.s4 1966171168
    %v82 = vunpack.c.0.s8 %v81
    %v83 = vlaneseq
    %v84 = vshrl.u32 %v83, 7
    %v85 = vsub.s32 %v82, %v84
    %v86 = vrot.slane %v72, %v85
    %v87 = vlaneseq
    %v88 = vshrl.u32 %v87, 7
    %v89 = vsub.s32 0, %v88
    %v90 = vrot.slane %v79, %v89
    %v91 = vlaneseq
    %v92 = vshrl.u32 %v91, 7
    %v93 = vsub.s32 0, %v92
    %v94 = vrot.slane %v86, %v93
    %vm97 = vcmask 261120
    %v99 = vsel %vm97, %v57, 0
    %v102 = vsel %vm97, %v58, 0
    %104 = vmatprep.subr.mxu0 0.0
    %105 = vmatpush1.msra.mxu0 0.0
    %106 = vmatprep.subr.mxu0 0.0
    %107 = vmatpush1.msra.mxu0 0.0
    %108 = vmatprep.subr.mxu0 0.0
    %109 = vmatpush1.msra.mxu0 0.0
    %110 = vmatprep.subr.mxu0 0.0
    %111 = vmatpush1.msra.mxu0 0.0
    %112 = vmatprep.subr.mxu0 0.0
    %113 = vmatpush1.msra.mxu0 0.0
    %114 = vmatprep.subr.mxu0 0.0
    %115 = vmatpush1.msra.mxu0 0.0
    %116 = vmatprep.subr.mxu0 0.0
    %117 = vmatpush1.msra.mxu0 0.0
    %118 = vmatprep.subr.mxu0 0.0
    %119 = vmatpush1.msra.mxu0 0.0
    %120 = vmatprep.subr.mxu0 0.0
    %121 = vmatpush1.msra.mxu0 0.0
    %122 = vmatprep.subr.mxu0 0.0
    %123 = vmatpush1.msra.mxu0 0.0
    %124 = vmatprep.subr.mxu0 0.0
    %125 = vmatpush1.msra.mxu0 0.0
    %126 = vmatprep.subr.mxu0 0.0
    %127 = vmatpush1.msra.mxu0 0.0
    %128 = vmatprep.subr.mxu0 0.0
    %129 = vmatpush1.msra.mxu0 %v62
    %130 = vmatprep.subr.mxu0 0.0
    %131 = vmatpush1.msra.mxu0 %v61
    %132 = vmatprep.subr.mxu0 0.0
    %133 = vmatpush1.msra.mxu0 %v60
    %134 = vmatprep.subr.mxu0 0.0
    %135 = vmatpush1.msra.mxu0 %v59
    %136 = vmatprep.subr.mxu0 0.0
    %137 = vmatpush2.msra.mxu0 0.0
    %138 = vmatprep.subr.mxu0 0.0
    %139 = vmatpush2.msra.mxu0 0.0
    %140 = vmatprep.subr.mxu0 0.0
    %141 = vmatpush2.msra.mxu0 0.0
    %142 = vmatprep.subr.mxu0 0.0
    %143 = vmatpush2.msra.mxu0 0.0
    %144 = vmatprep.subr.mxu0 0.0
    %145 = vmatpush2.msra.mxu0 0.0
    %146 = vmatprep.subr.mxu0 0.0
    %147 = vmatpush2.msra.mxu0 0.0
    %148 = vmatprep.subr.mxu0 0.0
    %149 = vmatpush2.msra.mxu0 0.0
    %150 = vmatprep.subr.mxu0 0.0
    %151 = vmatpush2.msra.mxu0 0.0
    %152 = vmatprep.subr.mxu0 0.0
    %153 = vmatpush2.msra.mxu0 0.0
    %154 = vmatprep.subr.mxu0 0.0
    %155 = vmatpush2.msra.mxu0 0.0
    %156 = vmatprep.subr.mxu0 0.0
    %157 = vmatpush2.msra.mxu0 0.0
    %158 = vmatprep.subr.mxu0 0.0
    %159 = vmatpush2.msra.mxu0 0.0
    %160 = vmatprep.subr.mxu0 0.0
    %161 = vmatpush2.msra.mxu0 0.0
    %162 = vmatprep.subr.mxu0 0.0
    %163 = vmatpush2.msra.mxu0 0.0
    %164 = vmatprep.subr.mxu0 0.0
    %165 = vmatpush2.msra.mxu0 0.0
    %166 = vmatprep.subr.mxu0 0.0
    %167 = vmatpush2.msra.mxu0 0.0
    %168 = vmatprep.mubr.f32.mxu0 0.0
    %169 = vmatmul.mubr.f32.gmra.mxu0 %v99
    %v170 = vpop.f32.mrf.mxu0
    %v171 = vadd.f32 %v90, %v170
    %v172 = vpop.f32.mrf.mxu0
    %173 = vmatprep.mubr.f32.mxu0 0.0
    %174 = vmatmul.mubr.f32.gmra.mxu0 %v102
    %v175 = vpop.f32.mrf.mxu0
    %v176 = vadd.f32 %v94, %v175
    %v177 = vpop.f32.mrf.mxu0
    %178 = vdwg.mxu0
    %v179 = vtanh.pop %v171
    %v180 = vtanh.pop %v176
    %v181 = vld [vmem:[%s3] sm:$0x1]
    %v183 = vlaneseq
    %v184 = vshrl.u32 %v183, 7
    %v185 = vsub.s32 0, %v184
    %v186 = vrot.slane %v181, %v185
    %v188 = vmul.f32 %v179, %v186
    %v189 = vmul.f32 %v180, %v186
    %v190 = vsel %vm97, %v188, 0.0
    %191 = vadd.xlane.f32.xlu0 %v190
    %v192 = vpop.xlane.xlu0 %191
    %v193 = vsel %vm97, %v189, 0.0
    %194 = vadd.xlane.f32.xlu0 %v193
    %v195 = vpop.xlane.xlu0 %194
    %v198 = vlaneseq
    %v199 = vand.u32 %v198, 127
    %v200 = vlaneseq
    %v201 = vshrl.u32 %v200, 7
    %v202 = vsub.s32 %v199, %v201
    %v203 = vrot.slane %v192, %v202
    %v204 = vlaneseq
    %v205 = vshrl.u32 %v204, 7
    %v206 = vsub.s32 %v199, %v205
    %v207 = vrot.slane %v195, %v206
    %vm208 = vcmask 1041409
    %v209 = vsel %vm208, %v207, %v203
    %vm211 = vcmask 58368
    %v212 = vsel %vm211, %v209, -inf
    %213 = vmax.xlane.f32.xlu0 %v212
    %v214 = vpop.xlane.xlu0 %213
    %v216 = vlaneseq
    %v217 = vshrl.u32 %v216, 7
    %v218 = vsub.s32 0, %v217
    %v219 = vrot.slane %v214, %v218
    %v220 = vlaneseq
    %v221 = vshrl.u32 %v220, 7
    %v222 = vsub.s32 1, %v221
    %v223 = vrot.slane %v214, %v222
    %v226 = vsub.f32 %v192, %v219
    %v227 = vsub.f32 %v195, %v223
    %v228 = vmul.f32 %v226, 1.442695
    %v229 = vpow.pop %v228
    %v230 = vmul.f32 %v227, 1.442695
    %v231 = vpow.pop %v230
    %234 = vset.pattern.permute.xlu0 0
    %235 = vperm.xlu0 %234, %v229
    %v236 = vpop.permute.xlu0 %235
    %237 = vset.pattern.permute.xlu0 0
    %238 = vperm.xlu0 %237, %v231
    %v239 = vpop.permute.xlu0 %238
    %v240 = vlaneseq
    %v241 = vshrl.u32 %v240, 7
    %v242 = vsub.s32 %v199, %v241
    %v243 = vrot.slane %v236, %v242
    %v244 = vlaneseq
    %v245 = vshrl.u32 %v244, 7
    %v246 = vsub.s32 %v199, %v245
    %v247 = vrot.slane %v239, %v246
    %v248 = vsel %vm208, %v247, %v243
    %v250 = vsel %vm211, %v248, 0.0
    %251 = vadd.xlane.f32.xlu0 %v250
    %v252 = vpop.xlane.xlu0 %251
    %v254 = vlaneseq
    %v255 = vshrl.u32 %v254, 7
    %v256 = vsub.s32 0, %v255
    %v257 = vrot.slane %v252, %v256
    %v258 = vlaneseq
    %v259 = vshrl.u32 %v258, 7
    %v260 = vsub.s32 1, %v259
    %v261 = vrot.slane %v252, %v260
    %v264 = vrcp.pop %v257
    %v265 = vmul.f32 %v229, %v264
    %v266 = vrcp.pop %v261
    %v267 = vmul.f32 %v231, %v266
    %270 = vset.pattern.permute.xlu0 0
    %271 = vperm.xlu0 %270, %v265
    %v272 = vpop.permute.xlu0 %271
    %273 = vset.pattern.permute.xlu0 0
    %274 = vperm.xlu0 %273, %v267
    %v275 = vpop.permute.xlu0 %274
    %v276 = vlaneseq
    %v277 = vshrl.u32 %v276, 7
    %v278 = vsub.s32 %v199, %v277
    %v279 = vrot.slane %v272, %v278
    %v280 = vlaneseq
    %v281 = vshrl.u32 %v280, 7
    %v282 = vsub.s32 %v199, %v281
    %v283 = vrot.slane %v275, %v282
    %v284 = vsel %vm208, %v283, %v279
    %286 = vst.msk [vmem:[#allocation8] sm:$0x3] %vm211, %v284
    // Predicated region
    $region30: #{tpu_custom_call.1} parent=1 // pred_check
      _
    $region31: #{tpu_custom_call.1} parent=1 // pred_check_branch
      %288 = sbr.rel (0) target = $region33
    $region32: #{tpu_custom_call.1} parent=1 // pred_region
      %s290 = ssub.s32 32, 32
      %291 = vsyncadd [#allocation4], %s290
      %s293 = sshll.u32 [#allocation8], 4
      %s294 = int_to_ptr.vmem [resolvable:$true] %s293
      %296 = dma.vmem_to_hbm [thread:$0]  %s294, 32, %s4, [#allocation4]
    $region33: #{tpu_custom_call.1} parent=1 // pred_fallthru
      _
    // Predicated region
    $region34: #{tpu_custom_call.1} parent=1 // pred_check
      _
    $region35: #{tpu_custom_call.1} parent=1 // pred_check_branch
      %298 = sbr.rel (0) target = $region37
    $region36: #{tpu_custom_call.1} parent=1 // pred_region
      %299 = dma.done [#allocation4], 32
    $region37: #{tpu_custom_call.1} parent=1 // pred_fallthru
      _
    %300 = vsyncpa [#allocation3], 1
    %301 = vsyncpa [#allocation6], 1
    %302 = vsyncpa [#allocation4], 1

</llo_original>
